<compile_context>
chip_gen: v6e
topology: v6e:2x2x1
jax: 0.10.0
libtpu: 0.0.40
codegen_flags: <defaults>
</compile_context>

<pallas_src>
import jax
import jax.numpy as jnp
from jax.experimental import pallas as pl
from jax.experimental.pallas import tpu as pltpu


def _attn_kernel(hidden_ref, enc_ref, mask_ref, wh_t_ref, we_t_ref, b_ref, ws_ref, out_ref):
    S, TB, H = enc_ref.shape

    hidden = hidden_ref[...]                        # (TB, H)  batch tile of the decoder state
    # TB is a multiple of 8 -> collapsing the leading dims is a tile-aligned no-op.
    enc2 = enc_ref[...].reshape(S * TB, H)          # (S*TB, H)

    # Linear(2H -> H) split into two MXU matmuls; weights arrive pre-transposed.
    h_proj = jnp.dot(hidden, wh_t_ref[...],
                     preferred_element_type=jnp.float32) + b_ref[...]          # (TB, H) f32
    e_proj = jnp.dot(enc2, we_t_ref[...],
                     preferred_element_type=jnp.float32)                       # (S*TB, H) f32

    # tanh in f32 (EUP); broadcast the per-batch hidden projection over S.
    energy = jnp.tanh(e_proj.reshape(S, TB, H) + h_proj[None, :, :])           # (S, TB, H)

    # score: Linear(H -> 1, bias=False)  -> (S, TB)
    ws = ws_ref[...]                                                           # (1, H)
    scores_sb = jnp.sum(energy * ws[None, :, :], axis=-1)                      # (S, TB)

    # Transpose only the tiny score matrix (never the (S,B,H) tensor): the out block
    # becomes (TB, S), lane-dense along S.
    scores = scores_sb.T                                                       # (TB, S)

    # masked_fill_(seq_mask.bool(), -1e12): any nonzero mask value masks.
    scores = jnp.where(mask_ref[...] != 0, jnp.float32(-1.0e12), scores)

    # softmax over S.  A fully-masked row degenerates to uniform (same as PyTorch);
    # max-subtraction keeps it NaN-free.
    m = jnp.max(scores, axis=-1, keepdims=True)
    e = jnp.exp(scores - m)
    inv = pl.reciprocal(jnp.sum(e, axis=-1, keepdims=True), approx=True)       # EUP, not a divide
    out_ref[...] = (e * inv).astype(out_ref.dtype)


def attn_forward(hidden, encoder_outputs, seq_mask, w_attn, b_attn, w_score,
                 *, max_batch_tile=128):
    """hidden: (1,B,H); encoder_outputs: (S,B,H); seq_mask: (B,S) or None (nonzero = mask).
    w_attn: (H, 2H) = attn.weight, b_attn: (H,) = attn.bias, w_score: (1, H) = score.weight.
    Returns (B, 1, S) attention weights, matching the PyTorch `Attn.forward`."""
    S, B, H = encoder_outputs.shape
    out_dtype = jnp.result_type(hidden.dtype, encoder_outputs.dtype)

    hidden_b = hidden.reshape(B, H)                       # drop leading 1 (metadata only)
    if seq_mask is None:
        seq_mask = jnp.zeros((B, S), dtype=jnp.float32)

    # Pre-transpose the weights once here so the kernel does plain row-major matmuls.
    # cat((hidden, enc), -1) @ W_attn.T  ==  hidden @ Wh.T + enc @ We.T
    wh_t = jnp.transpose(w_attn[:, :H])                   # (H, H)
    we_t = jnp.transpose(w_attn[:, H:])                   # (H, H)
    bias = b_attn.reshape(1, H)
    ws = w_score.reshape(1, H)

    # Batch tile: multiple of 8 sublanes (keeps the in-kernel collapse tile-aligned) and
    # capped so one encoder block stays a few MiB (Pallas double-buffers it; small enough
    # for v7x's 64 MiB VMEM as well as v5e/v6e).
    enc_row_bytes = S * H * jnp.dtype(encoder_outputs.dtype).itemsize
    budget_bytes = 4 * 1024 * 1024
    tb_cap = max(8, (budget_bytes // max(enc_row_bytes, 1)) // 8 * 8)
    tb = min(-(-B // 8) * 8, tb_cap, max(8, (max_batch_tile // 8) * 8))
    grid = (pl.cdiv(B, tb),)

    out = pl.pallas_call(
        _attn_kernel,
        grid=grid,
        out_shape=jax.ShapeDtypeStruct((B, S), out_dtype),
        in_specs=[
            pl.BlockSpec((tb, H), lambda i: (i, 0)),          # hidden (B, H): batch tile
            pl.BlockSpec((S, tb, H), lambda i: (0, i, 0)),    # enc (S, B, H): batch tile, S-major (no wrapper transpose)
            pl.BlockSpec((tb, S), lambda i: (i, 0)),          # seq_mask (B, S)
            pl.BlockSpec((H, H), lambda i: (0, 0)),           # Wh^T  (constant block index -> stays resident)
            pl.BlockSpec((H, H), lambda i: (0, 0)),           # We^T
            pl.BlockSpec((1, H), lambda i: (0, 0)),           # attn bias
            pl.BlockSpec((1, H), lambda i: (0, 0)),           # score weight
        ],
        out_specs=pl.BlockSpec((tb, S), lambda i: (i, 0)),
        compiler_params=pltpu.CompilerParams(
            dimension_semantics=("parallel",),                # independent batch tiles (megacore / 2 TCs)
            vmem_limit_bytes=48 * 1024 * 1024,                # > scoped default, < v7x's 64 MiB physical
        ),
    )(hidden_b, encoder_outputs, seq_mask, wh_t, we_t, bias, ws)

    return out[:, None, :]                                    # (B, 1, S)


if __name__ == "__main__":
    # Small shapes consistent with the module's forward.
    S, B, H = 8, 16, 32

    key = jax.random.PRNGKey(0)
    k1, k2, k3, k4, k5 = jax.random.split(key, 5)

    # Parameters with the nn.Linear shapes.
    w_attn = jax.random.normal(k1, (H, 2 * H), jnp.float32) * 0.1    # attn.weight  (H, 2H)
    b_attn = jax.random.normal(k2, (H,), jnp.float32) * 0.1          # attn.bias    (H,)
    w_score = jax.random.normal(k3, (1, H), jnp.float32) * 0.1       # score.weight (1, H)

    hidden = jax.random.normal(k4, (1, B, H), jnp.float32)
    encoder_outputs = jax.random.normal(k5, (S, B, H), jnp.float32)

    # Mask a few positions; include a negative nonzero value to exercise the
    # torch masked_fill_(mask.bool()) semantics (`!= 0`, not `> 0`).
    seq_mask = jnp.zeros((B, S), jnp.float32)
    seq_mask = seq_mask.at[1, -2:].set(1.0)
    seq_mask = seq_mask.at[3, 0].set(-2.0)

    # max_batch_tile=8 -> tb=8, grid=(2,): exercises the batch grid / pipelining path.
    out = attn_forward(hidden, encoder_outputs, seq_mask, w_attn, b_attn, w_score,
                       max_batch_tile=8)
    out = jax.block_until_ready(out)

    # Pure-JAX reference of the PyTorch semantics.
    hid_rep = jnp.broadcast_to(hidden, (S, B, H))
    energy_in = jnp.concatenate([hid_rep, encoder_outputs], axis=2).reshape(-1, 2 * H)
    e = jnp.tanh(energy_in @ w_attn.T + b_attn) @ w_score.T                    # (S*B, 1)
    e = e.reshape(S, B).T                                                      # (B, S)
    e = jnp.where(seq_mask != 0, -1.0e12, e)
    ref = jax.nn.softmax(e, axis=1)[:, None, :]                                # (B, 1, S)

    assert out.shape == (B, 1, S)
    max_err = jnp.max(jnp.abs(out - ref))
    # Tolerance covers the approximate EUP reciprocal in the softmax denominator.
    assert jnp.allclose(out, ref, atol=2e-3, rtol=2e-3), f"max_err={max_err}"
    print("KERNEL_OK")
</pallas_src>

<mosaic_0001>
module attributes {stable_mosaic.version = 11 : i64} {
  func.func @_attn_kernel(%arg0: i32, %arg1: memref<8x32xf32, #tpu.memory_space<vmem>>, %arg2: memref<8x8x32xf32, #tpu.memory_space<vmem>>, %arg3: memref<8x8xf32, #tpu.memory_space<vmem>>, %arg4: memref<32x32xf32, #tpu.memory_space<vmem>>, %arg5: memref<32x32xf32, #tpu.memory_space<vmem>>, %arg6: memref<1x32xf32, #tpu.memory_space<vmem>>, %arg7: memref<1x32xf32, #tpu.memory_space<vmem>>, %arg8: memref<8x8xf32, #tpu.memory_space<vmem>>) attributes {dimension_semantics = [#tpu.dimension_semantics<parallel>], iteration_bounds = array<i64: 2>, scalar_prefetch = 0 : i64, scratch_operands = 0 : i64, tpu.core_type = #tpu.core_type<tc>, window_params = [{transform_indices = @transform_0, window_bounds = array<i64: 8, 32>}, {transform_indices = @transform_1, window_bounds = array<i64: 8, 8, 32>}, {transform_indices = @transform_2, window_bounds = array<i64: 8, 8>}, {pipeline_mode = #tpu.pipeline_mode<synchronous>, transform_indices = @transform_3, window_bounds = array<i64: 32, 32>}, {pipeline_mode = #tpu.pipeline_mode<synchronous>, transform_indices = @transform_4, window_bounds = array<i64: 32, 32>}, {pipeline_mode = #tpu.pipeline_mode<synchronous>, transform_indices = @transform_5, window_bounds = array<i64: 1, 32>}, {pipeline_mode = #tpu.pipeline_mode<synchronous>, transform_indices = @transform_6, window_bounds = array<i64: 1, 32>}, {transform_indices = @transform_7, window_bounds = array<i64: 8, 8>}]} {
    %c0 = arith.constant 0 : index
    %c0_0 = arith.constant 0 : index
    %0 = vector.load %arg1[%c0, %c0_0] : memref<8x32xf32, #tpu.memory_space<vmem>>, vector<8x32xf32>
    %c0_1 = arith.constant 0 : index
    %c0_2 = arith.constant 0 : index
    %c0_3 = arith.constant 0 : index
    %1 = vector.load %arg2[%c0_1, %c0_2, %c0_3] : memref<8x8x32xf32, #tpu.memory_space<vmem>>, vector<8x8x32xf32>
    %2 = vector.shape_cast %1 : vector<8x8x32xf32> to vector<64x32xf32>
    %c0_4 = arith.constant 0 : index
    %c0_5 = arith.constant 0 : index
    %3 = vector.load %arg4[%c0_4, %c0_5] : memref<32x32xf32, #tpu.memory_space<vmem>>, vector<32x32xf32>
    %cst = arith.constant dense<0.000000e+00> : vector<8x32xf32>
    %4 = tpu.matmul %0, %3, %cst {dimension_numbers = #tpu.dot_dimension_numbers<[1], [0], [0], [1], [0, 0, 1, 1], [], []>} : vector<8x32xf32>, vector<32x32xf32>, vector<8x32xf32> -> vector<8x32xf32>
    %c0_6 = arith.constant 0 : index
    %c0_7 = arith.constant 0 : index
    %5 = vector.load %arg6[%c0_6, %c0_7] : memref<1x32xf32, #tpu.memory_space<vmem>>, vector<1x32xf32>
    %6 = vector.broadcast %5 : vector<1x32xf32> to vector<8x32xf32>
    %7 = arith.addf %4, %6 : vector<8x32xf32>
    %c0_8 = arith.constant 0 : index
    %c0_9 = arith.constant 0 : index
    %8 = vector.load %arg5[%c0_8, %c0_9] : memref<32x32xf32, #tpu.memory_space<vmem>>, vector<32x32xf32>
    %cst_10 = arith.constant dense<0.000000e+00> : vector<64x32xf32>
    %9 = tpu.matmul %2, %8, %cst_10 {dimension_numbers = #tpu.dot_dimension_numbers<[1], [0], [0], [1], [0, 0, 1, 1], [], []>} : vector<64x32xf32>, vector<32x32xf32>, vector<64x32xf32> -> vector<64x32xf32>
    %10 = vector.shape_cast %9 : vector<64x32xf32> to vector<8x8x32xf32>
    %11 = vector.shape_cast %7 : vector<8x32xf32> to vector<1x8x32xf32>
    %12 = vector.broadcast %11 : vector<1x8x32xf32> to vector<8x8x32xf32>
    %13 = arith.addf %10, %12 : vector<8x8x32xf32>
    %14 = math.tanh %13 : vector<8x8x32xf32>
    %c0_11 = arith.constant 0 : index
    %c0_12 = arith.constant 0 : index
    %15 = vector.load %arg7[%c0_11, %c0_12] : memref<1x32xf32, #tpu.memory_space<vmem>>, vector<1x32xf32>
    %16 = vector.shape_cast %15 : vector<1x32xf32> to vector<1x1x32xf32>
    %17 = vector.broadcast %16 : vector<1x1x32xf32> to vector<8x8x32xf32>
    %18 = arith.mulf %14, %17 : vector<8x8x32xf32>
    %cst_13 = arith.constant dense<0.000000e+00> : vector<8x8xf32>
    %19 = vector.multi_reduction <add>, %18, %cst_13 [2] : vector<8x8x32xf32> to vector<8x8xf32>
    %20 = tpu.transpose %19, [1, 0] : vector<8x8xf32> -> vector<8x8xf32>
    %c0_14 = arith.constant 0 : index
    %c0_15 = arith.constant 0 : index
    %21 = vector.load %arg3[%c0_14, %c0_15] : memref<8x8xf32, #tpu.memory_space<vmem>>, vector<8x8xf32>
    %cst_16 = arith.constant 0.000000e+00 : f32
    %22 = vector.broadcast %cst_16 : f32 to vector<8x8xf32>
    %23 = arith.cmpf one, %21, %22 : vector<8x8xf32>
    %cst_17 = arith.constant -9.99999995E+11 : f32
    %24 = vector.broadcast %cst_17 : f32 to vector<8x8xf32>
    %25 = arith.select %23, %24, %20 : vector<8x8xi1>, vector<8x8xf32>
    %cst_18 = arith.constant dense<0xFF800000> : vector<8xf32>
    %26 = vector.multi_reduction <maximumf>, %25, %cst_18 [1] : vector<8x8xf32> to vector<8xf32>
    %27 = vector.shape_cast %26 : vector<8xf32> to vector<8x1xf32>
    %28 = vector.broadcast %27 : vector<8x1xf32> to vector<8x8xf32>
    %29 = arith.subf %25, %28 : vector<8x8xf32>
    %30 = math.exp %29 : vector<8x8xf32>
    %cst_19 = arith.constant dense<0.000000e+00> : vector<8xf32>
    %31 = vector.multi_reduction <add>, %30, %cst_19 [1] : vector<8x8xf32> to vector<8xf32>
    %32 = vector.shape_cast %31 : vector<8xf32> to vector<8x1xf32>
    %33 = tpu.reciprocal %32 {approx = true} : vector<8x1xf32> -> vector<8x1xf32>
    %34 = vector.broadcast %33 : vector<8x1xf32> to vector<8x8xf32>
    %35 = arith.mulf %30, %34 : vector<8x8xf32>
    %c0_20 = arith.constant 0 : index
    %c0_21 = arith.constant 0 : index
    %36 = vector.load %arg8[%c0_20, %c0_21] : memref<8x8xf32, #tpu.memory_space<vmem>>, vector<8x8xf32>
    tpu.vector_store %arg8[%c0_20, %c0_21], %35 {strides = array<i32>} : memref<8x8xf32, #tpu.memory_space<vmem>>, vector<8x8xf32>,
    return
  }
  func.func @transform_0(%arg0: i32) -> (i32, i32) {
    %c0_i32 = arith.constant 0 : i32
    %c0_i32_0 = arith.constant 0 : i32
    return %arg0, %c0_i32 : i32, i32
  }
  func.func @transform_1(%arg0: i32) -> (i32, i32, i32) {
    %c0_i32 = arith.constant 0 : i32
    %c0_i32_0 = arith.constant 0 : i32
    %c0_i32_1 = arith.constant 0 : i32
    return %c0_i32, %arg0, %c0_i32_0 : i32, i32, i32
  }
  func.func @transform_2(%arg0: i32) -> (i32, i32) {
    %c0_i32 = arith.constant 0 : i32
    %c0_i32_0 = arith.constant 0 : i32
    return %arg0, %c0_i32 : i32, i32
  }
  func.func @transform_3(%arg0: i32) -> (i32, i32) {
    %c0_i32 = arith.constant 0 : i32
    %c0_i32_0 = arith.constant 0 : i32
    %c0_i32_1 = arith.constant 0 : i32
    return %c0_i32, %c0_i32_0 : i32, i32
  }
  func.func @transform_4(%arg0: i32) -> (i32, i32) {
    %c0_i32 = arith.constant 0 : i32
    %c0_i32_0 = arith.constant 0 : i32
    %c0_i32_1 = arith.constant 0 : i32
    return %c0_i32, %c0_i32_0 : i32, i32
  }
  func.func @transform_5(%arg0: i32) -> (i32, i32) {
    %c0_i32 = arith.constant 0 : i32
    %c0_i32_0 = arith.constant 0 : i32
    %c0_i32_1 = arith.constant 0 : i32
    return %c0_i32, %c0_i32_0 : i32, i32
  }
  func.func @transform_6(%arg0: i32) -> (i32, i32) {
    %c0_i32 = arith.constant 0 : i32
    %c0_i32_0 = arith.constant 0 : i32
    %c0_i32_1 = arith.constant 0 : i32
    return %c0_i32, %c0_i32_0 : i32, i32
  }
  func.func @transform_7(%arg0: i32) -> (i32, i32) {
    %c0_i32 = arith.constant 0 : i32
    %c0_i32_0 = arith.constant 0 : i32
    return %arg0, %c0_i32 : i32, i32
  }
}

</mosaic_0001>

<llo_original>
// kernel: tpu_custom_call.1
$region0: #{tpu_custom_call.1}
  #allocation0 [shape = 'u32[]', space=smem, size = 0x4, offset = 0x4, fixed_abs, tag = 'smem constant byte address 0x4 - core index']
  #allocation1 [shape = 'u32[144,128]{1,0:T(1,128)}', space=vmem, size = 0x12000, scoped, tag = 'internal scratch']
  %s0 = inlined_call_operand.vmem [shape: f32[16,32], index: 0, kind: input, shape index: {}]
  %s1 = inlined_call_operand.hbm [shape: f32[8,16,32], index: 1, kind: input, shape index: {}]
  %s2 = inlined_call_operand.vmem [shape: f32[16,8], index: 2, kind: input, shape index: {}]
  %s3 = inlined_call_operand.hbm [shape: f32[32,32], index: 3, kind: input, shape index: {}]
  %s4 = inlined_call_operand.hbm [shape: f32[32,32], index: 4, kind: input, shape index: {}]
  %s5 = inlined_call_operand.vmem [shape: f32[1,32], index: 5, kind: input, shape index: {}]
  %s6 = inlined_call_operand.vmem [shape: f32[1,32], index: 6, kind: input, shape index: {}]
  %s7 = inlined_call_operand.vmem [shape: f32[16,8], index: 7, kind: output, shape index: {}]
  %s8 = sld [smem:[#allocation0]]
  $region73: #{tpu_custom_call.1} parent=0
    _
  %s10 = ssub.s32 1, %s8
  %s11 = scalar_select 0, %s10, %s8
  $region1: #{tpu_custom_call.1} parent=0
    #allocation2 [shape = 'u8[65536]{0}', space=vmem, size = 0x10000, scoped, tag = 'input window, operand 1']
    #allocation3 [shape = 's32[2]{0}', space=sflag, size = 0x8, scoped, tag = 'scoped memory for tpu_custom_call.1']
    #allocation4 [shape = 'u8[16384]{0}', space=vmem, size = 0x4000, scoped, tag = 'input window, operand 3, single buffered']
    #allocation5 [shape = 's32[1]{0}', space=sflag, size = 0x4, scoped, tag = 'scoped memory for tpu_custom_call.1']
    #allocation6 [shape = 'u8[16384]{0}', space=vmem, size = 0x4000, scoped, tag = 'input window, operand 4, single buffered']
    %12 = vsyncpa [#allocation3], 0
    %s13 = scalar_lea.sflag [#allocation3], 1
    %14 = vsyncpa %s13, 0
    %15 = vsyncpa [#allocation5], 0
    loop: start=0, step=1, limit=4
    $region2: #{tpu_custom_call.1} parent=1 // loop_pre_header
      _
    $region3: #{tpu_custom_call.1} parent=1 // loop_header
      %s17 = sphi 0, %s21
      %p18 = scmp.ge.s32.totalorder %s17, 4
      %s27 = sphi 0, %s29
      %s30 = sphi 0, %s27
      %s31 = sphi 0, %s30
      %s47 = sphi 0, %s31
      %s53 = sphi 0, %s55
      %s56 = sphi 0, %s53
      %s57 = sphi 0, %s56
      %s73 = sphi 0, %s57
      %s79 = sphi 0, %s81
      %s82 = sphi 0, %s79
      %s83 = sphi 0, %s82
      %s99 = sphi 0, %s83
      %s103 = sphi 0, %s103
      %s105 = sphi 0, %s103
      %s106 = sphi 0, %s105
      %s120 = sphi 0, %s106
      %s124 = sphi 0, %s124
      %s126 = sphi 0, %s124
      %s127 = sphi 0, %s126
      %s141 = sphi 0, %s127
      %s145 = sphi 0, %s145
      %s147 = sphi 0, %s145
      %s148 = sphi 0, %s147
      %s162 = sphi 0, %s148
      %s166 = sphi 0, %s166
      %s168 = sphi 0, %s166
      %s169 = sphi 0, %s168
      %s183 = sphi 0, %s169
      %s189 = sphi 0, %s191
      %s192 = sphi 0, %s189
      %s193 = sphi 0, %s192
      %s209 = sphi 0, %s193
    $region4: #{tpu_custom_call.1} parent=1 // loop_header_branch
      %20 = sbr.rel (%p18) target = $region8
    $region5: #{tpu_custom_call.1} parent=1 // loop_body
      %s22 = ssub.s32 %s17, 1
      %s23 = ssub.s32 %s17, 2
      %s24 = sadd.s32 %s17, 1
      %s25 = ssub.s32 %s17, %s24
      %p26 = scmp.eq.s32.totalorder %s25, 0
      %s28 = sadd.s32 %s27, 1
      %s29 = scalar_select %p26, %s27, %s28
      %p32 = pneg %p26
      %p33 = scmp.eq.s32.totalorder %s17, 1
      %p34 = por %p32, %p33
      %p35 = scmp.ne.s32.totalorder %s27, %s30
      %p36 = scmp.eq.s32.totalorder %s17, 0
      %p37 = por %p35, %p36
      %p38 = scmp.ne.s32.totalorder %s27, %s30
      %p39 = scmp.eq.s32.totalorder %s22, 1
      %p40 = por %p38, %p39
      %p41 = scmp.ne.s32.totalorder %s30, %s31
      %p42 = scmp.eq.s32.totalorder %s22, 0
      %p43 = por %p41, %p42
      %p44 = scmp.ne.s32.totalorder %s30, %s31
      %p45 = scmp.eq.s32.totalorder %s23, 1
      %p46 = por %p44, %p45
      %p48 = scmp.ne.s32.totalorder %s31, %s47
      %p49 = scmp.eq.s32.totalorder %s23, 0
      %p50 = por %p48, %p49
      %s51 = ssub.s32 %s17, %s24
      %p52 = scmp.eq.s32.totalorder %s51, 0
      %s54 = sadd.s32 %s53, 1
      %s55 = scalar_select %p52, %s53, %s54
      %p58 = pneg %p52
      %p59 = scmp.eq.s32.totalorder %s17, 1
      %p60 = por %p58, %p59
      %p61 = scmp.ne.s32.totalorder %s53, %s56
      %p62 = scmp.eq.s32.totalorder %s17, 0
      %p63 = por %p61, %p62
      %p64 = scmp.ne.s32.totalorder %s53, %s56
      %p65 = scmp.eq.s32.totalorder %s22, 1
      %p66 = por %p64, %p65
      %p67 = scmp.ne.s32.totalorder %s56, %s57
      %p68 = scmp.eq.s32.totalorder %s22, 0
      %p69 = por %p67, %p68
      %p70 = scmp.ne.s32.totalorder %s56, %s57
      %p71 = scmp.eq.s32.totalorder %s23, 1
      %p72 = por %p70, %p71
      %p74 = scmp.ne.s32.totalorder %s57, %s73
      %p75 = scmp.eq.s32.totalorder %s23, 0
      %p76 = por %p74, %p75
      %s77 = ssub.s32 %s17, %s24
      %p78 = scmp.eq.s32.totalorder %s77, 0
      %s80 = sadd.s32 %s79, 1
      %s81 = scalar_select %p78, %s79, %s80
      %p84 = pneg %p78
      %p85 = scmp.eq.s32.totalorder %s17, 1
      %p86 = por %p84, %p85
      %p87 = scmp.ne.s32.totalorder %s79, %s82
      %p88 = scmp.eq.s32.totalorder %s17, 0
      %p89 = por %p87, %p88
      %p90 = scmp.ne.s32.totalorder %s79, %s82
      %p91 = scmp.eq.s32.totalorder %s22, 1
      %p92 = por %p90, %p91
      %p93 = scmp.ne.s32.totalorder %s82, %s83
      %p94 = scmp.eq.s32.totalorder %s22, 0
      %p95 = por %p93, %p94
      %p96 = scmp.ne.s32.totalorder %s82, %s83
      %p97 = scmp.eq.s32.totalorder %s23, 1
      %p98 = por %p96, %p97
      %p100 = scmp.ne.s32.totalorder %s83, %s99
      %p101 = scmp.eq.s32.totalorder %s23, 0
      %p102 = por %p100, %p101
      %s104 = sadd.s32 %s103, 1
      %p107 = scmp.eq.s32.totalorder %s17, 1
      %p108 = scmp.ne.s32.totalorder %s103, %s105
      %p109 = scmp.eq.s32.totalorder %s17, 0
      %p110 = por %p108, %p109
      %p111 = scmp.ne.s32.totalorder %s103, %s105
      %p112 = scmp.eq.s32.totalorder %s22, 1
      %p113 = por %p111, %p112
      %p114 = scmp.ne.s32.totalorder %s105, %s106
      %p115 = scmp.eq.s32.totalorder %s22, 0
      %p116 = por %p114, %p115
      %p117 = scmp.ne.s32.totalorder %s105, %s106
      %p118 = scmp.eq.s32.totalorder %s23, 1
      %p119 = por %p117, %p118
      %p121 = scmp.ne.s32.totalorder %s106, %s120
      %p122 = scmp.eq.s32.totalorder %s23, 0
      %p123 = por %p121, %p122
      %s125 = sadd.s32 %s124, 1
      %p128 = scmp.eq.s32.totalorder %s17, 1
      %p129 = scmp.ne.s32.totalorder %s124, %s126
      %p130 = scmp.eq.s32.totalorder %s17, 0
      %p131 = por %p129, %p130
      %p132 = scmp.ne.s32.totalorder %s124, %s126
      %p133 = scmp.eq.s32.totalorder %s22, 1
      %p134 = por %p132, %p133
      %p135 = scmp.ne.s32.totalorder %s126, %s127
      %p136 = scmp.eq.s32.totalorder %s22, 0
      %p137 = por %p135, %p136
      %p138 = scmp.ne.s32.totalorder %s126, %s127
      %p139 = scmp.eq.s32.totalorder %s23, 1
      %p140 = por %p138, %p139
      %p142 = scmp.ne.s32.totalorder %s127, %s141
      %p143 = scmp.eq.s32.totalorder %s23, 0
      %p144 = por %p142, %p143
      %s146 = sadd.s32 %s145, 1
      %p149 = scmp.eq.s32.totalorder %s17, 1
      %p150 = scmp.ne.s32.totalorder %s145, %s147
      %p151 = scmp.eq.s32.totalorder %s17, 0
      %p152 = por %p150, %p151
      %p153 = scmp.ne.s32.totalorder %s145, %s147
      %p154 = scmp.eq.s32.totalorder %s22, 1
      %p155 = por %p153, %p154
      %p156 = scmp.ne.s32.totalorder %s147, %s148
      %p157 = scmp.eq.s32.totalorder %s22, 0
      %p158 = por %p156, %p157
      %p159 = scmp.ne.s32.totalorder %s147, %s148
      %p160 = scmp.eq.s32.totalorder %s23, 1
      %p161 = por %p159, %p160
      %p163 = scmp.ne.s32.totalorder %s148, %s162
      %p164 = scmp.eq.s32.totalorder %s23, 0
      %p165 = por %p163, %p164
      %s167 = sadd.s32 %s166, 1
      %p170 = scmp.eq.s32.totalorder %s17, 1
      %p171 = scmp.ne.s32.totalorder %s166, %s168
      %p172 = scmp.eq.s32.totalorder %s17, 0
      %p173 = por %p171, %p172
      %p174 = scmp.ne.s32.totalorder %s166, %s168
      %p175 = scmp.eq.s32.totalorder %s22, 1
      %p176 = por %p174, %p175
      %p177 = scmp.ne.s32.totalorder %s168, %s169
      %p178 = scmp.eq.s32.totalorder %s22, 0
      %p179 = por %p177, %p178
      %p180 = scmp.ne.s32.totalorder %s168, %s169
      %p181 = scmp.eq.s32.totalorder %s23, 1
      %p182 = por %p180, %p181
      %p184 = scmp.ne.s32.totalorder %s169, %s183
      %p185 = scmp.eq.s32.totalorder %s23, 0
      %p186 = por %p184, %p185
      %s187 = ssub.s32 %s17, %s24
      %p188 = scmp.eq.s32.totalorder %s187, 0
      %s190 = sadd.s32 %s189, 1
      %s191 = scalar_select %p188, %s189, %s190
      %p194 = pneg %p188
      %p195 = scmp.eq.s32.totalorder %s17, 1
      %p196 = por %p194, %p195
      %p197 = scmp.ne.s32.totalorder %s189, %s192
      %p198 = scmp.eq.s32.totalorder %s17, 0
      %p199 = por %p197, %p198
      %p200 = scmp.ne.s32.totalorder %s189, %s192
      %p201 = scmp.eq.s32.totalorder %s22, 1
      %p202 = por %p200, %p201
      %p203 = scmp.ne.s32.totalorder %s192, %s193
      %p204 = scmp.eq.s32.totalorder %s22, 0
      %p205 = por %p203, %p204
      %p206 = scmp.ne.s32.totalorder %s192, %s193
      %p207 = scmp.eq.s32.totalorder %s23, 1
      %p208 = por %p206, %p207
      %p210 = scmp.ne.s32.totalorder %s193, %s209
      %p211 = scmp.eq.s32.totalorder %s23, 0
      %p212 = por %p210, %p211
      %p213 = scmp.le.s32.totalorder 1, %s17
      %p214 = scmp.lt.s32.totalorder %s17, 3
      %p215 = pnand %p213, %p214
      %p216 = pneg %p215
      // Predicated region
      $region9: #{tpu_custom_call.1} parent=5 // pred_check
        _
      $region10: #{tpu_custom_call.1} parent=5 // pred_check_branch
        %218 = sbr.rel (%p215) target = $region12
      $region11: #{tpu_custom_call.1} parent=5 // pred_region
        %s219 = ssub.s32 %s17, 1
        // Predicated region
        $region13: #{tpu_custom_call.1} parent=11 // pred_check
          %p220 = pneg %p116
        $region14: #{tpu_custom_call.1} parent=11 // pred_check_branch
          %222 = sbr.rel (%p220) target = $region16
        $region15: #{tpu_custom_call.1} parent=11 // pred_region
          %s224 = ssub.s32 512, 512
          %225 = vsyncadd [#allocation5], %s224
          %s226 = sshll.u32 [#allocation4], 4
          %s227 = int_to_ptr.vmem [resolvable:$true] %s226
          %232 = dma.hbm_to_vmem [thread:$0]  %s3, 512, %s227, [#allocation5], 128, 128, 8
        $region16: #{tpu_custom_call.1} parent=11 // pred_fallthru
          _
        // Predicated region
        $region17: #{tpu_custom_call.1} parent=11 // pred_check
          %p233 = pneg %p137
        $region18: #{tpu_custom_call.1} parent=11 // pred_check_branch
          %235 = sbr.rel (%p233) target = $region20
        $region19: #{tpu_custom_call.1} parent=11 // pred_region
          %s237 = ssub.s32 512, 512
          %238 = vsyncadd [#allocation5], %s237
          %s239 = sshll.u32 [#allocation6], 4
          %s240 = int_to_ptr.vmem [resolvable:$true] %s239
          %245 = dma.hbm_to_vmem [thread:$0]  %s4, 512, %s240, [#allocation5], 128, 128, 8
        $region20: #{tpu_custom_call.1} parent=11 // pred_fallthru
          _
        // Predicated region
        $region21: #{tpu_custom_call.1} parent=11 // pred_check
          %p246 = pneg %p158
        $region22: #{tpu_custom_call.1} parent=11 // pred_check_branch
          %248 = sbr.rel (%p246) target = $region24
        $region23: #{tpu_custom_call.1} parent=11 // pred_region
          _
        $region24: #{tpu_custom_call.1} parent=11 // pred_fallthru
          _
        // Predicated region
        $region25: #{tpu_custom_call.1} parent=11 // pred_check
          %p249 = pneg %p179
        $region26: #{tpu_custom_call.1} parent=11 // pred_check_branch
          %251 = sbr.rel (%p249) target = $region28
        $region27: #{tpu_custom_call.1} parent=11 // pred_region
          _
        $region28: #{tpu_custom_call.1} parent=11 // pred_fallthru
          _
      $region12: #{tpu_custom_call.1} parent=5 // pred_fallthru
        _
      %p252 = scmp.lt.s32.totalorder %s17, 2
      // Predicated region
      $region29: #{tpu_custom_call.1} parent=5 // pred_check
        %p253 = pneg %p252
      $region30: #{tpu_custom_call.1} parent=5 // pred_check_branch
        %255 = sbr.rel (%p253) target = $region32
      $region31: #{tpu_custom_call.1} parent=5 // pred_region
        // Predicated region
        $region33: #{tpu_custom_call.1} parent=31 // pred_check
          %p256 = pneg %p37
        $region34: #{tpu_custom_call.1} parent=31 // pred_check_branch
          %258 = sbr.rel (%p256) target = $region36
        $region35: #{tpu_custom_call.1} parent=31 // pred_region
          %p259 = scmp.lt.s32.totalorder %s17, 1
          %s260 = scalar_select %p259, %s17, 1
          %s261 = smul.addr %s260, 8
          %s262 = scalar_lea.vmem %s0, %s261
        $region36: #{tpu_custom_call.1} parent=31 // pred_fallthru
          _
        // Predicated region
        $region37: #{tpu_custom_call.1} parent=31 // pred_check
          %p263 = pneg %p63
        $region38: #{tpu_custom_call.1} parent=31 // pred_check_branch
          %265 = sbr.rel (%p263) target = $region40
        $region39: #{tpu_custom_call.1} parent=31 // pred_region
          %s266 = sand.u32 %s53, 1
          %s267 = scalar_lea.sflag [#allocation3], %s266
          %s268 = sand.u32 %s53, 1
          %s269 = smul.addr %s268, 64
          %s270 = scalar_lea.vmem [#allocation2], %s269
          %s272 = ssub.s32 1024, 1024
          %273 = vsyncadd %s267, %s272
          %s274 = smul.addr %s17, 128
          %s275 = scalar_lea.hbm %s1, %s274
          %s276 = sshll.u32 %s270, 4
          %s277 = int_to_ptr.vmem [resolvable:$true] %s276
          %282 = dma.hbm_to_vmem [thread:$0]  %s275, 1024, %s277, %s267, 256, 128, 8
        $region40: #{tpu_custom_call.1} parent=31 // pred_fallthru
          _
        // Predicated region
        $region41: #{tpu_custom_call.1} parent=31 // pred_check
          %p283 = pneg %p89
        $region42: #{tpu_custom_call.1} parent=31 // pred_check_branch
          %285 = sbr.rel (%p283) target = $region44
        $region43: #{tpu_custom_call.1} parent=31 // pred_region
          %p286 = scmp.lt.s32.totalorder %s17, 1
          %s287 = scalar_select %p286, %s17, 1
          %s288 = smul.addr %s287, 8
          %s289 = scalar_lea.vmem %s2, %s288
        $region44: #{tpu_custom_call.1} parent=31 // pred_fallthru
          _
      $region32: #{tpu_custom_call.1} parent=5 // pred_fallthru
        _
      %p290 = scmp.le.s32.totalorder 1, %s17
      %p291 = scmp.lt.s32.totalorder %s17, 3
      %p292 = pnand %p290, %p291
      %p293 = pneg %p292
      // Predicated region
      $region45: #{tpu_custom_call.1} parent=5 // pred_check
        _
      $region46: #{tpu_custom_call.1} parent=5 // pred_check_branch
        %295 = sbr.rel (%p292) target = $region48
      $region47: #{tpu_custom_call.1} parent=5 // pred_region
        %s296 = ssub.s32 %s17, 1
        %s297 = sand.u32 %s56, 1
        %s298 = scalar_lea.sflag [#allocation3], %s297
        %s299 = sand.u32 %s56, 1
        %s300 = smul.addr %s299, 64
        %s301 = scalar_lea.vmem [#allocation2], %s300
        // Predicated region
        $region49: #{tpu_custom_call.1} parent=47 // pred_check
          %p302 = pneg %p69
        $region50: #{tpu_custom_call.1} parent=47 // pred_check_branch
          %304 = sbr.rel (%p302) target = $region52
        $region51: #{tpu_custom_call.1} parent=47 // pred_region
          %305 = dma.done %s298, 1024
        $region52: #{tpu_custom_call.1} parent=47 // pred_fallthru
          _
        // Predicated region
        $region53: #{tpu_custom_call.1} parent=47 // pred_check
          %p306 = pneg %p116
        $region54: #{tpu_custom_call.1} parent=47 // pred_check_branch
          %308 = sbr.rel (%p306) target = $region56
        $region55: #{tpu_custom_call.1} parent=47 // pred_region
          %309 = dma.done [#allocation5], 512
        $region56: #{tpu_custom_call.1} parent=47 // pred_fallthru
          _
        // Predicated region
        $region57: #{tpu_custom_call.1} parent=47 // pred_check
          %p310 = pneg %p137
        $region58: #{tpu_custom_call.1} parent=47 // pred_check_branch
          %312 = sbr.rel (%p310) target = $region60
        $region59: #{tpu_custom_call.1} parent=47 // pred_region
          %313 = dma.done [#allocation5], 512
        $region60: #{tpu_custom_call.1} parent=47 // pred_fallthru
          _
        %p314 = scmp.lt.s32.totalorder %s22, 1
        %s315 = scalar_select %p314, %s22, 1
        %s316 = smul.addr %s315, 8
        %s317 = scalar_lea.vmem %s0, %s316
        %p318 = pneg %p43
        %p319 = pneg %p40
        %s320 = sand.u32 %s56, 1
        %s321 = scalar_lea.sflag [#allocation3], %s320
        %s322 = sand.u32 %s56, 1
        %s323 = smul.addr %s322, 64
        %s324 = scalar_lea.vmem [#allocation2], %s323
        %p325 = pneg %p69
        %p326 = pneg %p66
        %p327 = scmp.lt.s32.totalorder %s22, 1
        %s328 = scalar_select %p327, %s22, 1
        %s329 = smul.addr %s328, 8
        %s330 = scalar_lea.vmem %s2, %s329
        %p331 = pneg %p95
        %p332 = pneg %p92
        %p333 = pneg %p116
        %p334 = pneg %p113
        %p335 = pneg %p137
        %p336 = pneg %p134
        %p337 = pneg %p158
        %p338 = pneg %p155
        %p339 = pneg %p179
        %p340 = pneg %p176
        %p341 = pneg %p205
        %p342 = pneg %p202
        %p343 = scmp.lt.s32.totalorder %s22, 1
        %s344 = scalar_select %p343, %s22, 1
        %s345 = smul.addr %s344, 8
        %s346 = scalar_lea.vmem %s7, %s345
        %p347 = scmp.lt.s32.totalorder %s22, 1
        %s348 = scalar_select %p347, %s22, 1
        %s349 = smul.addr %s348, 8
        %s350 = scalar_lea.vmem %s0, %s349
        %p351 = scmp.lt.s32.totalorder %s22, 1
        %s352 = scalar_select %p351, %s22, 1
        %s353 = smul.addr %s352, 8
        %s354 = scalar_lea.vmem %s2, %s353
        %p355 = scmp.lt.s32.totalorder %s22, 1
        %s356 = scalar_select %p355, %s22, 1
        %s357 = smul.addr %s356, 8
        %s358 = scalar_lea.vmem %s7, %s357
        %v359 = vld [vmem:[%s350] sm:$0xff]
        %v360 = vld [vmem:[%s301] sm:$0xff]
        %v361 = vld [vmem:[%s301 + $0x8] sm:$0xff]
        %v362 = vld [vmem:[%s301 + $0x10] sm:$0xff]
        %v363 = vld [vmem:[%s301 + $0x18] sm:$0xff]
        %v364 = vld [vmem:[%s301 + $0x20] sm:$0xff]
        %v365 = vld [vmem:[%s301 + $0x28] sm:$0xff]
        %v366 = vld [vmem:[%s301 + $0x30] sm:$0xff]
        %v367 = vld [vmem:[%s301 + $0x38] sm:$0xff]
        %v368 = vld [vmem:[#allocation4] sm:$0xff]
        %v369 = vld [vmem:[#allocation4 + $0x8] sm:$0xff]
        %v370 = vld [vmem:[#allocation4 + $0x10] sm:$0xff]
        %v371 = vld [vmem:[#allocation4 + $0x18] sm:$0xff]
        %v372 = vld [vmem:[%s5] sm:$0x1]
        %v374 = vlaneseq
        %v375 = vshrl.u32 %v374, 7
        %v376 = vsub.s32 0, %v375
        %v377 = vrot.slane %v372, %v376
        %vm379 = vcmask 261120
        %v381 = vsel %vm379, %v359, 0
        %383 = vmatprep.subr.mxu0 0.0
        %384 = vmatpush1.msra.mxu0 0.0
        %385 = vmatprep.subr.mxu0 0.0
        %386 = vmatpush1.msra.mxu0 0.0
        %387 = vmatprep.subr.mxu0 0.0
        %388 = vmatpush1.msra.mxu0 0.0
        %389 = vmatprep.subr.mxu0 0.0
        %390 = vmatpush1.msra.mxu0 0.0
        %391 = vmatprep.subr.mxu0 0.0
        %392 = vmatpush1.msra.mxu0 0.0
        %393 = vmatprep.subr.mxu0 0.0
        %394 = vmatpush1.msra.mxu0 0.0
        %395 = vmatprep.subr.mxu0 0.0
        %396 = vmatpush1.msra.mxu0 0.0
        %397 = vmatprep.subr.mxu0 0.0
        %398 = vmatpush1.msra.mxu0 0.0
        %399 = vmatprep.subr.mxu0 0.0
        %400 = vmatpush1.msra.mxu0 0.0
        %401 = vmatprep.subr.mxu0 0.0
        %402 = vmatpush1.msra.mxu0 0.0
        %403 = vmatprep.subr.mxu0 0.0
        %404 = vmatpush1.msra.mxu0 0.0
        %405 = vmatprep.subr.mxu0 0.0
        %406 = vmatpush1.msra.mxu0 0.0
        %407 = vmatprep.subr.mxu0 0.0
        %408 = vmatpush1.msra.mxu0 %v371
        %409 = vmatprep.subr.mxu0 0.0
        %410 = vmatpush1.msra.mxu0 %v370
        %411 = vmatprep.subr.mxu0 0.0
        %412 = vmatpush1.msra.mxu0 %v369
        %413 = vmatprep.subr.mxu0 0.0
        %414 = vmatpush1.msra.mxu0 %v368
        %415 = vmatprep.subr.mxu0 0.0
        %416 = vmatpush2.msra.mxu0 0.0
        %417 = vmatprep.subr.mxu0 0.0
        %418 = vmatpush2.msra.mxu0 0.0
        %419 = vmatprep.subr.mxu0 0.0
        %420 = vmatpush2.msra.mxu0 0.0
        %421 = vmatprep.subr.mxu0 0.0
        %422 = vmatpush2.msra.mxu0 0.0
        %423 = vmatprep.subr.mxu0 0.0
        %424 = vmatpush2.msra.mxu0 0.0
        %425 = vmatprep.subr.mxu0 0.0
        %426 = vmatpush2.msra.mxu0 0.0
        %427 = vmatprep.subr.mxu0 0.0
        %428 = vmatpush2.msra.mxu0 0.0
        %429 = vmatprep.subr.mxu0 0.0
        %430 = vmatpush2.msra.mxu0 0.0
        %431 = vmatprep.subr.mxu0 0.0
        %432 = vmatpush2.msra.mxu0 0.0
        %433 = vmatprep.subr.mxu0 0.0
        %434 = vmatpush2.msra.mxu0 0.0
        %435 = vmatprep.subr.mxu0 0.0
        %436 = vmatpush2.msra.mxu0 0.0
        %437 = vmatprep.subr.mxu0 0.0
        %438 = vmatpush2.msra.mxu0 0.0
        %439 = vmatprep.subr.mxu0 0.0
        %440 = vmatpush2.msra.mxu0 0.0
        %441 = vmatprep.subr.mxu0 0.0
        %442 = vmatpush2.msra.mxu0 0.0
        %443 = vmatprep.subr.mxu0 0.0
        %444 = vmatpush2.msra.mxu0 0.0
        %445 = vmatprep.subr.mxu0 0.0
        %446 = vmatpush2.msra.mxu0 0.0
        %447 = vmatprep.mubr.f32.mxu0 0.0
        %448 = vmatmul.mubr.f32.gmra.mxu0 %v381
        %v449 = vpop.f32.mrf.mxu0
        %v450 = vadd.f32 %v377, %v449
        %v451 = vpop.f32.mrf.mxu0
        %452 = vdwg.mxu0
        %v453 = vld [vmem:[#allocation6] sm:$0xff]
        %v454 = vld [vmem:[#allocation6 + $0x8] sm:$0xff]
        %v455 = vld [vmem:[#allocation6 + $0x10] sm:$0xff]
        %v456 = vld [vmem:[#allocation6 + $0x18] sm:$0xff]
        %v458 = vsel %vm379, %v360, 0
        %v461 = vsel %vm379, %v361, 0
        %v464 = vsel %vm379, %v362, 0
        %v467 = vsel %vm379, %v363, 0
        %v470 = vsel %vm379, %v364, 0
        %v473 = vsel %vm379, %v365, 0
        %v476 = vsel %vm379, %v366, 0
        %v479 = vsel %vm379, %v367, 0
        %481 = vmatprep.subr.mxu0 0.0
        %482 = vmatpush1.msra.mxu0 0.0
        %483 = vmatprep.subr.mxu0 0.0
        %484 = vmatpush1.msra.mxu0 0.0
        %485 = vmatprep.subr.mxu0 0.0
        %486 = vmatpush1.msra.mxu0 0.0
        %487 = vmatprep.subr.mxu0 0.0
        %488 = vmatpush1.msra.mxu0 0.0
        %489 = vmatprep.subr.mxu0 0.0
        %490 = vmatpush1.msra.mxu0 0.0
        %491 = vmatprep.subr.mxu0 0.0
        %492 = vmatpush1.msra.mxu0 0.0
        %493 = vmatprep.subr.mxu0 0.0
        %494 = vmatpush1.msra.mxu0 0.0
        %495 = vmatprep.subr.mxu0 0.0
        %496 = vmatpush1.msra.mxu0 0.0
        %497 = vmatprep.subr.mxu0 0.0
        %498 = vmatpush1.msra.mxu0 0.0
        %499 = vmatprep.subr.mxu0 0.0
        %500 = vmatpush1.msra.mxu0 0.0
        %501 = vmatprep.subr.mxu0 0.0
        %502 = vmatpush1.msra.mxu0 0.0
        %503 = vmatprep.subr.mxu0 0.0
        %504 = vmatpush1.msra.mxu0 0.0
        %505 = vmatprep.subr.mxu0 0.0
        %506 = vmatpush1.msra.mxu0 %v456
        %507 = vmatprep.subr.mxu0 0.0
        %508 = vmatpush1.msra.mxu0 %v455
        %509 = vmatprep.subr.mxu0 0.0
        %510 = vmatpush1.msra.mxu0 %v454
        %511 = vmatprep.subr.mxu0 0.0
        %512 = vmatpush1.msra.mxu0 %v453
        %513 = vmatprep.subr.mxu0 0.0
        %514 = vmatpush2.msra.mxu0 0.0
        %515 = vmatprep.subr.mxu0 0.0
        %516 = vmatpush2.msra.mxu0 0.0
        %517 = vmatprep.subr.mxu0 0.0
        %518 = vmatpush2.msra.mxu0 0.0
        %519 = vmatprep.subr.mxu0 0.0
        %520 = vmatpush2.msra.mxu0 0.0
        %521 = vmatprep.subr.mxu0 0.0
        %522 = vmatpush2.msra.mxu0 0.0
        %523 = vmatprep.subr.mxu0 0.0
        %524 = vmatpush2.msra.mxu0 0.0
        %525 = vmatprep.subr.mxu0 0.0
        %526 = vmatpush2.msra.mxu0 0.0
        %527 = vmatprep.subr.mxu0 0.0
        %528 = vmatpush2.msra.mxu0 0.0
        %529 = vmatprep.subr.mxu0 0.0
        %530 = vmatpush2.msra.mxu0 0.0
        %531 = vmatprep.subr.mxu0 0.0
        %532 = vmatpush2.msra.mxu0 0.0
        %533 = vmatprep.subr.mxu0 0.0
        %534 = vmatpush2.msra.mxu0 0.0
        %535 = vmatprep.subr.mxu0 0.0
        %536 = vmatpush2.msra.mxu0 0.0
        %537 = vmatprep.subr.mxu0 0.0
        %538 = vmatpush2.msra.mxu0 0.0
        %539 = vmatprep.subr.mxu0 0.0
        %540 = vmatpush2.msra.mxu0 0.0
        %541 = vmatprep.subr.mxu0 0.0
        %542 = vmatpush2.msra.mxu0 0.0
        %543 = vmatprep.subr.mxu0 0.0
        %544 = vmatpush2.msra.mxu0 0.0
        %545 = vmatprep.mubr.f32.mxu0 0.0
        %546 = vmatmul.mubr.f32.gmra.mxu0 %v458
        %v547 = vpop.f32.mrf.mxu0
        %v548 = vadd.f32 0.0, %v547
        %v549 = vpop.f32.mrf.mxu0
        %550 = vmatprep.mubr.f32.mxu0 0.0
        %551 = vmatmul.mubr.f32.gmra.mxu0 %v461
        %v552 = vpop.f32.mrf.mxu0
        %v553 = vadd.f32 0.0, %v552
        %v554 = vpop.f32.mrf.mxu0
        %555 = vmatprep.mubr.f32.mxu0 0.0
        %556 = vmatmul.mubr.f32.gmra.mxu0 %v464
        %v557 = vpop.f32.mrf.mxu0
        %v558 = vadd.f32 0.0, %v557
        %v559 = vpop.f32.mrf.mxu0
        %560 = vmatprep.mubr.f32.mxu0 0.0
        %561 = vmatmul.mubr.f32.gmra.mxu0 %v467
        %v562 = vpop.f32.mrf.mxu0
        %v563 = vadd.f32 0.0, %v562
        %v564 = vpop.f32.mrf.mxu0
        %565 = vmatprep.mubr.f32.mxu0 0.0
        %566 = vmatmul.mubr.f32.gmra.mxu0 %v470
        %v567 = vpop.f32.mrf.mxu0
        %v568 = vadd.f32 0.0, %v567
        %v569 = vpop.f32.mrf.mxu0
        %570 = vmatprep.mubr.f32.mxu0 0.0
        %571 = vmatmul.mubr.f32.gmra.mxu0 %v473
        %v572 = vpop.f32.mrf.mxu0
        %v573 = vadd.f32 0.0, %v572
        %v574 = vpop.f32.mrf.mxu0
        %575 = vmatprep.mubr.f32.mxu0 0.0
        %576 = vmatmul.mubr.f32.gmra.mxu0 %v476
        %v577 = vpop.f32.mrf.mxu0
        %v578 = vadd.f32 0.0, %v577
        %v579 = vpop.f32.mrf.mxu0
        %580 = vmatprep.mubr.f32.mxu0 0.0
        %581 = vmatmul.mubr.f32.gmra.mxu0 %v479
        %v582 = vpop.f32.mrf.mxu0
        %v583 = vadd.f32 0.0, %v582
        %v584 = vpop.f32.mrf.mxu0
        %585 = vdwg.mxu0
        %v586 = vadd.f32 %v548, %v450
        %v587 = vadd.f32 %v553, %v450
        %v588 = vadd.f32 %v558, %v450
        %v589 = vadd.f32 %v563, %v450
        %v590 = vadd.f32 %v568, %v450
        %v591 = vadd.f32 %v573, %v450
        %v592 = vadd.f32 %v578, %v450
        %v593 = vadd.f32 %v583, %v450
        %v594 = vtanh.pop %v586
        %v595 = vtanh.pop %v587
        %v596 = vtanh.pop %v588
        %v597 = vtanh.pop %v589
        %v598 = vtanh.pop %v590
        %v599 = vtanh.pop %v591
        %v600 = vtanh.pop %v592
        %v601 = vtanh.pop %v593
        %v602 = vld [vmem:[%s6] sm:$0x1]
        %v604 = vlaneseq
        %v605 = vshrl.u32 %v604, 7
        %v606 = vsub.s32 0, %v605
        %v607 = vrot.slane %v602, %v606
        %v609 = vmul.f32 %v594, %v607
        %v610 = vmul.f32 %v595, %v607
        %v611 = vmul.f32 %v596, %v607
        %v612 = vmul.f32 %v597, %v607
        %v613 = vmul.f32 %v598, %v607
        %v614 = vmul.f32 %v599, %v607
        %v615 = vmul.f32 %v600, %v607
        %v616 = vmul.f32 %v601, %v607
        %v617 = vsel %vm379, %v609, 0.0
        %618 = vadd.xlane.f32.xlu0 %v617
        %v619 = vpop.xlane.xlu0 %618
        %v620 = vsel %vm379, %v610, 0.0
        %621 = vadd.xlane.f32.xlu0 %v620
        %v622 = vpop.xlane.xlu0 %621
        %v623 = vsel %vm379, %v611, 0.0
        %624 = vadd.xlane.f32.xlu0 %v623
        %v625 = vpop.xlane.xlu0 %624
        %v626 = vsel %vm379, %v612, 0.0
        %627 = vadd.xlane.f32.xlu0 %v626
        %v628 = vpop.xlane.xlu0 %627
        %v629 = vsel %vm379, %v613, 0.0
        %630 = vadd.xlane.f32.xlu0 %v629
        %v631 = vpop.xlane.xlu0 %630
        %v632 = vsel %vm379, %v614, 0.0
        %633 = vadd.xlane.f32.xlu0 %v632
        %v634 = vpop.xlane.xlu0 %633
        %v635 = vsel %vm379, %v615, 0.0
        %636 = vadd.xlane.f32.xlu0 %v635
        %v637 = vpop.xlane.xlu0 %636
        %v638 = vsel %vm379, %v616, 0.0
        %639 = vadd.xlane.f32.xlu0 %v638
        %v640 = vpop.xlane.xlu0 %639
        %v649 = vlaneseq
        %v650 = vand.u32 %v649, 127
        %v651 = vlaneseq
        %v652 = vshrl.u32 %v651, 7
        %v653 = vsub.s32 %v650, %v652
        %v654 = vrot.slane %v619, %v653
        %v655 = vlaneseq
        %v656 = vshrl.u32 %v655, 7
        %v657 = vsub.s32 %v650, %v656
        %v658 = vrot.slane %v622, %v657
        %v659 = vlaneseq
        %v660 = vshrl.u32 %v659, 7
        %v661 = vsub.s32 %v650, %v660
        %v662 = vrot.slane %v625, %v661
        %v663 = vlaneseq
        %v664 = vshrl.u32 %v663, 7
        %v665 = vsub.s32 %v650, %v664
        %v666 = vrot.slane %v628, %v665
        %v667 = vlaneseq
        %v668 = vshrl.u32 %v667, 7
        %v669 = vsub.s32 %v650, %v668
        %v670 = vrot.slane %v631, %v669
        %v671 = vlaneseq
        %v672 = vshrl.u32 %v671, 7
        %v673 = vsub.s32 %v650, %v672
        %v674 = vrot.slane %v634, %v673
        %v675 = vlaneseq
        %v676 = vshrl.u32 %v675, 7
        %v677 = vsub.s32 %v650, %v676
        %v678 = vrot.slane %v637, %v677
        %v679 = vlaneseq
        %v680 = vshrl.u32 %v679, 7
        %v681 = vsub.s32 %v650, %v680
        %v682 = vrot.slane %v640, %v681
        %vm683 = vcmask 1041409
        %v684 = vsel %vm683, %v658, %v654
        %vm685 = vcmask 1042434
        %v686 = vsel %vm685, %v662, %v684
        %vm687 = vcmask 1043459
        %v688 = vsel %vm687, %v666, %v686
        %vm689 = vcmask 1044484
        %v690 = vsel %vm689, %v670, %v688
        %vm691 = vcmask 1045509
        %v692 = vsel %vm691, %v674, %v690
        %vm693 = vcmask 1046534
        %v694 = vsel %vm693, %v678, %v692
        %vm695 = vcmask 1047559
        %v696 = vsel %vm695, %v682, %v694
        %698 = vxpose.xlu0.b32.start [1/16] %v696, 128
        %699 = vxpose.xlu0.b32.cont [2/16] 0.0, 128
        %700 = vxpose.xlu0.b32.cont [3/16] 0.0, 128
        %701 = vxpose.xlu0.b32.cont [4/16] 0.0, 128
        %702 = vxpose.xlu0.b32.cont [5/16] 0.0, 128
        %703 = vxpose.xlu0.b32.cont [6/16] 0.0, 128
        %704 = vxpose.xlu0.b32.cont [7/16] 0.0, 128
        %705 = vxpose.xlu0.b32.cont [8/16] 0.0, 128
        %706 = vxpose.xlu0.b32.cont [9/16] 0.0, 128
        %707 = vxpose.xlu0.b32.cont [10/16] 0.0, 128
        %708 = vxpose.xlu0.b32.cont [11/16] 0.0, 128
        %709 = vxpose.xlu0.b32.cont [12/16] 0.0, 128
        %710 = vxpose.xlu0.b32.cont [13/16] 0.0, 128
        %711 = vxpose.xlu0.b32.cont [14/16] 0.0, 128
        %712 = vxpose.xlu0.b32.cont [15/16] 0.0, 128
        %713 = vxpose.xlu0.b32.end [16/16] 0.0, 128
        %v714 = vpop.trf.xlu0
        %v715 = vpop.trf.xlu0
        %v716 = vpop.trf.xlu0
        %v717 = vpop.trf.xlu0
        %v718 = vpop.trf.xlu0
        %v719 = vpop.trf.xlu0
        %v720 = vpop.trf.xlu0
        %v721 = vpop.trf.xlu0
        %v722 = vpop.trf.xlu0
        %v723 = vpop.trf.xlu0
        %v724 = vpop.trf.xlu0
        %v725 = vpop.trf.xlu0
        %v726 = vpop.trf.xlu0
        %v727 = vpop.trf.xlu0
        %v728 = vpop.trf.xlu0
        %v729 = vpop.trf.xlu0
        %v730 = vld [vmem:[%s354] sm:$0xff]
        %vm731 = vcmp.ne.f32.partialorder %v730, 0.0
        %v732 = vsel %vm731, -1e+12, %v714
        %vm733 = vcmask 64512
        %v734 = vsel %vm733, %v732, -inf
        %735 = vmax.xlane.f32.xlu0 %v734
        %v736 = vpop.xlane.xlu0 %735
        %v737 = vsub.f32 %v732, %v736
        %v738 = vmul.f32 %v737, 1.442695
        %v739 = vpow.pop %v738
        %v740 = vsel %vm733, %v739, 0.0
        %741 = vadd.xlane.f32.xlu0 %v740
        %v742 = vpop.xlane.xlu0 %741
        %v743 = vrcp.pop %v742
        %v744 = vmul.f32 %v739, %v743
        %745 = vst.msk [vmem:[%s358] sm:$0xff] %vm733, %v744
        %p746 = scmp.lt.s32.totalorder %s22, 1
        %s747 = scalar_select %p746, %s22, 1
        %s748 = smul.addr %s747, 8
        %s749 = scalar_lea.vmem %s7, %s748
        // Predicated region
        $region61: #{tpu_custom_call.1} parent=47 // pred_check
          %p750 = pneg %p202
        $region62: #{tpu_custom_call.1} parent=47 // pred_check_branch
          %752 = sbr.rel (%p750) target = $region64
        $region63: #{tpu_custom_call.1} parent=47 // pred_region
          _
        $region64: #{tpu_custom_call.1} parent=47 // pred_fallthru
          _
      $region48: #{tpu_custom_call.1} parent=5 // pred_fallthru
        _
      %p753 = scmp.le.s32.totalorder 2, %s17
      // Predicated region
      $region65: #{tpu_custom_call.1} parent=5 // pred_check
        %p754 = pneg %p753
      $region66: #{tpu_custom_call.1} parent=5 // pred_check_branch
        %756 = sbr.rel (%p754) target = $region68
      $region67: #{tpu_custom_call.1} parent=5 // pred_region
        %s757 = ssub.s32 %s17, 2
        // Predicated region
        $region69: #{tpu_custom_call.1} parent=67 // pred_check
          %p758 = pneg %p208
        $region70: #{tpu_custom_call.1} parent=67 // pred_check_branch
          %760 = sbr.rel (%p758) target = $region72
        $region71: #{tpu_custom_call.1} parent=67 // pred_region
          %p761 = scmp.lt.s32.totalorder %s23, 1
          %s762 = scalar_select %p761, %s23, 1
          %s763 = smul.addr %s762, 8
          %s764 = scalar_lea.vmem %s7, %s763
        $region72: #{tpu_custom_call.1} parent=67 // pred_fallthru
          _
      $region68: #{tpu_custom_call.1} parent=5 // pred_fallthru
        _
    $region6: #{tpu_custom_call.1} parent=1 // loop_footer
      %s21 = sadd.s32 1, %s17
    $region7: #{tpu_custom_call.1} parent=1 // loop_footer_branch
      %16 = sbr.rel target = $region3
    $region8: #{tpu_custom_call.1} parent=1 // loop_exit
      _
    %765 = vsyncpa [#allocation3], 1
    %s766 = scalar_lea.sflag [#allocation3], 1
    %767 = vsyncpa %s766, 1
    %768 = vsyncpa [#allocation5], 1

</llo_original>
